<compile_context>
chip_gen: v7x
topology: tpu7x:2x2x1
jax: 0.10.0
libtpu: 0.0.40
codegen_flags: <defaults>
</compile_context>

<pallas_src>
import functools

import jax
import jax.numpy as jnp
from jax.experimental import pallas as pl
from jax.experimental.pallas import tpu as pltpu

HIDDEN = 512  # fixed by the module definition


def _round_up(x, m):
    return ((x + m - 1) // m) * m


def mlp_kernel(x_ref, w1_ref, b1_ref, w2_ref, b2_ref, o_ref, acc_ref,
               *, nk, tk, d_total):
    k = pl.program_id(1)

    @pl.when(k == 0)
    def _():
        acc_ref[...] = jnp.zeros_like(acc_ref)

    # First linear: cast x to bf16 on the VPU (hidden under MXU), then
    # (TB, tk)bf16 @ (tk, 512)bf16 with f32 accumulation on the MXU.
    xk = x_ref[...].astype(jnp.bfloat16)
    w1k = w1_ref[...]
    if nk > 1 and d_total % tk != 0:
        # Ragged last K tile: zero the out-of-range columns/rows so garbage in
        # the padded region can never reach the accumulator.
        valid = d_total - k * tk
        col = jax.lax.broadcasted_iota(jnp.int32, xk.shape, 1)
        xk = jnp.where(col < valid, xk, 0)
        row = jax.lax.broadcasted_iota(jnp.int32, w1k.shape, 0)
        w1k = jnp.where(row < valid, w1k, 0)
    acc_ref[...] += jnp.dot(xk, w1k, preferred_element_type=jnp.float32)

    @pl.when(k == nk - 1)
    def _():
        h = jnp.maximum(acc_ref[...] + b1_ref[...], 0.0)            # bias + ReLU (f32)
        # Second linear (512 -> 1): VPU mul + lane (XLU) reduction.
        logits = jnp.sum(h * w2_ref[...], axis=-1, keepdims=True)   # (TB, 1) f32
        logits = logits + b2_ref[0, 0]                              # scalar bias (SMEM)
        o_ref[...] = jax.nn.sigmoid(logits).astype(o_ref.dtype)


def prepare_params(w1, b1, w2, b2):
    """One-time conversion of module params into kernel layout / dtype."""
    w1_bf = jnp.asarray(w1, jnp.float32).astype(jnp.bfloat16)       # (D, 512) == torch W1.T
    b1_row = jnp.asarray(b1, jnp.float32).reshape(1, HIDDEN)
    w2_row = jnp.asarray(w2, jnp.float32).reshape(1, HIDDEN)        # torch W2 is (1, 512)
    b2_s = jnp.asarray(b2, jnp.float32).reshape(1, 1)
    return w1_bf, b1_row, w2_row, b2_s


def _choose_tiling(batch, d, x_itemsize):
    # K (reduction) tiling: whole D for small/medium D; 1024-wide K tiles beyond.
    if d <= 2048:
        tk, nk = d, 1
    else:
        tk = 1024
        nk = pl.cdiv(d, tk)
    budget = 32 * 1024 * 1024                       # accounted VMEM for our buffers
    w1_bufs = 1 if nk == 1 else 2                   # W1 single-buffered when grid-invariant
    fixed = w1_bufs * tk * HIDDEN * 2 + 4 * HIDDEN * 4
    per_row = 2 * tk * x_itemsize + HIDDEN * 4 + 2 * 4   # x (2 bufs) + f32 acc + out
    bb = max(256, (budget - fixed) // per_row)
    bb = min(bb, 8192)
    if bb >= 128:
        bb = (bb // 128) * 128
    # v7x has 2 TensorCores: make sure a big-enough batch yields >= 2 grid tiles.
    if batch >= 512 and pl.cdiv(batch, bb) < 2:
        bb = max(256, _round_up(pl.cdiv(batch, 2), 128))
    # Never allocate more rows than the batch actually has (8-row granularity).
    bb = min(bb, _round_up(batch, 8))
    return bb, tk, nk


@functools.partial(jax.jit, static_argnames=("block_b",))
def binary_classification_forward(x, w1_bf, b1_row, w2_row, b2_s, *, block_b=None):
    """x: (B, D) f32 or bf16; remaining args from prepare_params()."""
    B, D = x.shape
    bb, tk, nk = _choose_tiling(B, D, x.dtype.itemsize)
    if block_b is not None:
        bb = block_b
    nb = pl.cdiv(B, bb)

    kernel = functools.partial(mlp_kernel, nk=nk, tk=tk, d_total=D)

    if nk == 1:
        # Whole-D W1 is grid-invariant -> fetch once, single VMEM buffer.
        w1_spec = pl.BlockSpec((tk, HIDDEN), lambda i, k: (k, 0),
                               pipeline_mode=pl.Buffered(1))
    else:
        # K-tiled W1 changes with k -> keep default double-buffering.
        w1_spec = pl.BlockSpec((tk, HIDDEN), lambda i, k: (k, 0))

    out = pl.pallas_call(
        kernel,
        out_shape=jax.ShapeDtypeStruct((B, 1), jnp.float32),
        grid_spec=pltpu.PrefetchScalarGridSpec(
            num_scalar_prefetch=0,
            grid=(nb, nk),
            in_specs=[
                # x: tiled along batch and D -> pipelined DMA under MXU compute.
                pl.BlockSpec((bb, tk), lambda i, k: (i, k)),
                w1_spec,
                # b1 / w2: grid-invariant rows, fetched once, single buffer.
                pl.BlockSpec((1, HIDDEN), lambda i, k: (0, 0),
                             pipeline_mode=pl.Buffered(1)),
                pl.BlockSpec((1, HIDDEN), lambda i, k: (0, 0),
                             pipeline_mode=pl.Buffered(1)),
                # b2: single scalar, kept on the scalar path (SMEM).
                pl.BlockSpec(memory_space=pltpu.MemorySpace.SMEM),
            ],
            out_specs=pl.BlockSpec((bb, 1), lambda i, k: (i, 0)),
            scratch_shapes=[pltpu.VMEM((bb, HIDDEN), jnp.float32)],
        ),
        compiler_params=pltpu.CompilerParams(
            # Batch tiles independent -> shard across both TCs on v7x;
            # D axis is a reduction -> arbitrary.
            dimension_semantics=("parallel", "arbitrary"),
            # Above v5e/v6e/v7x default scoped limits, below v7x 64 MiB physical.
            vmem_limit_bytes=48 * 1024 * 1024,
        ),
    )(x, w1_bf, b1_row, w2_row, b2_s)
    return out


def init_params(key, input_size):
    # Deterministic init mimicking nn.Linear's U(-1/sqrt(fan_in), 1/sqrt(fan_in)).
    k1, k2, k3, k4 = jax.random.split(key, 4)
    bound1 = 1.0 / jnp.sqrt(input_size)
    bound2 = 1.0 / jnp.sqrt(HIDDEN)
    w1 = jax.random.uniform(k1, (input_size, HIDDEN), jnp.float32, -bound1, bound1)
    b1 = jax.random.uniform(k2, (HIDDEN,), jnp.float32, -bound1, bound1)
    w2 = jax.random.uniform(k3, (HIDDEN, 1), jnp.float32, -bound2, bound2)
    b2 = jax.random.uniform(k4, (1,), jnp.float32, -bound2, bound2)
    return w1, b1, w2, b2


def _references(x, w1, b1, w2, b2):
    # bf16-matched reference (kernel rounds x and W1 to bf16 before the MXU).
    xb = x.astype(jnp.bfloat16).astype(jnp.float32)
    w1b = w1.astype(jnp.bfloat16).astype(jnp.float32)
    h = jnp.maximum(xb @ w1b + b1.reshape(1, -1), 0.0)
    match = jax.nn.sigmoid(h @ w2 + b2.reshape(1, 1))
    # Pure-f32 reference (semantics of the PyTorch module).
    f32 = jax.nn.sigmoid(
        jnp.maximum(x @ w1 + b1.reshape(1, -1), 0.0) @ w2 + b2.reshape(1, 1))
    return match, f32


if __name__ == "__main__":
    key = jax.random.PRNGKey(0)
    kx, kp, kx2, kp2 = jax.random.split(key, 4)

    # Case 1: small batch, ragged batch tile (B=10 is not a multiple of 8).
    batch, input_size = 10, 32
    x = jax.random.normal(kx, (batch, input_size), jnp.float32)
    w1, b1, w2, b2 = init_params(kp, input_size)
    params = prepare_params(w1, b1, w2, b2)          # weight prep hoisted, done once
    out = jax.block_until_ready(binary_classification_forward(x, *params))
    assert out.shape == (batch, 1)
    ref_match, ref_f32 = _references(x, w1, b1, w2, b2)
    assert jnp.allclose(out, ref_match, atol=2e-3), jnp.max(jnp.abs(out - ref_match))
    assert jnp.allclose(out, ref_f32, atol=3e-2), jnp.max(jnp.abs(out - ref_f32))

    # Case 2: multi-tile grid (3 batch tiles, ragged last tile) to exercise the
    # pipelined / "parallel" batch axis.
    batch2, input_size2 = 300, 160
    x2 = jax.random.normal(kx2, (batch2, input_size2), jnp.float32)
    w1_2, b1_2, w2_2, b2_2 = init_params(kp2, input_size2)
    params2 = prepare_params(w1_2, b1_2, w2_2, b2_2)
    out2 = jax.block_until_ready(
        binary_classification_forward(x2, *params2, block_b=128))
    assert out2.shape == (batch2, 1)
    ref_match2, ref_f32_2 = _references(x2, w1_2, b1_2, w2_2, b2_2)
    assert jnp.allclose(out2, ref_match2, atol=2e-3), jnp.max(jnp.abs(out2 - ref_match2))
    assert jnp.allclose(out2, ref_f32_2, atol=3e-2), jnp.max(jnp.abs(out2 - ref_f32_2))

    print("KERNEL_OK")
</pallas_src>

<mosaic_0001>
module attributes {stable_mosaic.version = 11 : i64} {
  func.func @mlp_kernel(%arg0: i32, %arg1: i32, %arg2: memref<16x32xf32, #tpu.memory_space<vmem>>, %arg3: memref<32x512xbf16, #tpu.memory_space<vmem>>, %arg4: memref<1x512xf32, #tpu.memory_space<vmem>>, %arg5: memref<1x512xf32, #tpu.memory_space<vmem>>, %arg6: memref<1x1xf32, #tpu.memory_space<smem>>, %arg7: memref<16x1xf32, #tpu.memory_space<vmem>>, %arg8: memref<16x512xf32, #tpu.memory_space<vmem>>) attributes {dimension_semantics = [#tpu.dimension_semantics<parallel>, #tpu.dimension_semantics<arbitrary>], iteration_bounds = array<i64: 1, 1>, scalar_prefetch = 0 : i64, scratch_operands = 1 : i64, tpu.core_type = #tpu.core_type<tc>, window_params = [{transform_indices = @transform_0, window_bounds = array<i64: 16, 32>}, {pipeline_mode = #tpu.pipeline_mode<synchronous>, transform_indices = @transform_1, window_bounds = array<i64: 32, 512>}, {pipeline_mode = #tpu.pipeline_mode<synchronous>, transform_indices = @transform_2, window_bounds = array<i64: 1, 512>}, {pipeline_mode = #tpu.pipeline_mode<synchronous>, transform_indices = @transform_3, window_bounds = array<i64: 1, 512>}, {transform_indices = @transform_4, window_bounds = array<i64: 1, 1>}, {transform_indices = @transform_5, window_bounds = array<i64: 16, 1>}]} {
    %c0_i32 = arith.constant 0 : i32
    %0 = arith.cmpi eq, %arg1, %c0_i32 : i32
    %1 = arith.extui %0 : i1 to i32
    %c0_i32_0 = arith.constant 0 : i32
    %2 = arith.cmpi ne, %1, %c0_i32_0 : i32
    scf.if %2 {
      %cst_10 = arith.constant 0.000000e+00 : f32
      %13 = vector.broadcast %cst_10 : f32 to vector<16x512xf32>
      %c0_11 = arith.constant 0 : index
      %c0_12 = arith.constant 0 : index
      %14 = vector.load %arg8[%c0_11, %c0_12] : memref<16x512xf32, #tpu.memory_space<vmem>>, vector<16x512xf32>
      tpu.vector_store %arg8[%c0_11, %c0_12], %13 {strides = array<i32>} : memref<16x512xf32, #tpu.memory_space<vmem>>, vector<16x512xf32>,
    } else {
    }
    %c0 = arith.constant 0 : index
    %c0_1 = arith.constant 0 : index
    %3 = vector.load %arg2[%c0, %c0_1] : memref<16x32xf32, #tpu.memory_space<vmem>>, vector<16x32xf32>
    %4 = arith.truncf %3 : vector<16x32xf32> to vector<16x32xbf16>
    %c0_2 = arith.constant 0 : index
    %c0_3 = arith.constant 0 : index
    %5 = vector.load %arg3[%c0_2, %c0_3] : memref<32x512xbf16, #tpu.memory_space<vmem>>, vector<32x512xbf16>
    %c0_4 = arith.constant 0 : index
    %c0_5 = arith.constant 0 : index
    %6 = vector.load %arg8[%c0_4, %c0_5] : memref<16x512xf32, #tpu.memory_space<vmem>>, vector<16x512xf32>
    %cst = arith.constant dense<0.000000e+00> : vector<16x512xf32>
    %7 = tpu.matmul %4, %5, %cst {dimension_numbers = #tpu.dot_dimension_numbers<[1], [0], [0], [1], [0, 0, 1, 1], [], []>} : vector<16x32xbf16>, vector<32x512xbf16>, vector<16x512xf32> -> vector<16x512xf32>
    %8 = arith.addf %6, %7 : vector<16x512xf32>
    %c0_6 = arith.constant 0 : index
    %c0_7 = arith.constant 0 : index
    %9 = vector.load %arg8[%c0_6, %c0_7] : memref<16x512xf32, #tpu.memory_space<vmem>>, vector<16x512xf32>
    tpu.vector_store %arg8[%c0_6, %c0_7], %8 {strides = array<i32>} : memref<16x512xf32, #tpu.memory_space<vmem>>, vector<16x512xf32>,
    %c0_i32_8 = arith.constant 0 : i32
    %10 = arith.cmpi eq, %arg1, %c0_i32_8 : i32
    %11 = arith.extui %10 : i1 to i32
    %c0_i32_9 = arith.constant 0 : i32
    %12 = arith.cmpi ne, %11, %c0_i32_9 : i32
    scf.if %12 {
      %c0_10 = arith.constant 0 : index
      %c0_11 = arith.constant 0 : index
      %13 = vector.load %arg8[%c0_10, %c0_11] : memref<16x512xf32, #tpu.memory_space<vmem>>, vector<16x512xf32>
      %c0_12 = arith.constant 0 : index
      %c0_13 = arith.constant 0 : index
      %14 = vector.load %arg4[%c0_12, %c0_13] : memref<1x512xf32, #tpu.memory_space<vmem>>, vector<1x512xf32>
      %15 = vector.broadcast %14 : vector<1x512xf32> to vector<16x512xf32>
      %16 = arith.addf %13, %15 : vector<16x512xf32>
      %cst_14 = arith.constant 0.000000e+00 : f32
      %17 = vector.broadcast %cst_14 : f32 to vector<16x512xf32>
      %18 = arith.maximumf %16, %17 : vector<16x512xf32>
      %c0_15 = arith.constant 0 : index
      %c0_16 = arith.constant 0 : index
      %19 = vector.load %arg5[%c0_15, %c0_16] : memref<1x512xf32, #tpu.memory_space<vmem>>, vector<1x512xf32>
      %20 = vector.broadcast %19 : vector<1x512xf32> to vector<16x512xf32>
      %21 = arith.mulf %18, %20 : vector<16x512xf32>
      %cst_17 = arith.constant dense<0.000000e+00> : vector<16xf32>
      %22 = vector.multi_reduction <add>, %21, %cst_17 [1] : vector<16x512xf32> to vector<16xf32>
      %23 = vector.shape_cast %22 : vector<16xf32> to vector<16x1xf32>
      %c0_18 = arith.constant 0 : index
      %c0_19 = arith.constant 0 : index
      %24 = memref.load %arg6[%c0_18, %c0_19] : memref<1x1xf32, #tpu.memory_space<smem>>
      %25 = vector.broadcast %24 : f32 to vector<16x1xf32>
      %26 = arith.addf %23, %25 : vector<16x1xf32>
      %27 = arith.negf %26 : vector<16x1xf32>
      %28 = math.exp %27 : vector<16x1xf32>
      %cst_20 = arith.constant 1.000000e+00 : f32
      %29 = vector.broadcast %cst_20 : f32 to vector<16x1xf32>
      %30 = arith.addf %29, %28 : vector<16x1xf32>
      %31 = arith.divf %29, %30 : vector<16x1xf32>
      %c0_21 = arith.constant 0 : index
      %c0_22 = arith.constant 0 : index
      %32 = vector.load %arg7[%c0_21, %c0_22] : memref<16x1xf32, #tpu.memory_space<vmem>>, vector<16x1xf32>
      tpu.vector_store %arg7[%c0_21, %c0_22], %31 {strides = array<i32>} : memref<16x1xf32, #tpu.memory_space<vmem>>, vector<16x1xf32>,
    } else {
    }
    return
  }
  func.func @transform_0(%arg0: i32, %arg1: i32) -> (i32, i32) {
    %c0_i32 = arith.constant 0 : i32
    return %arg0, %arg1 : i32, i32
  }
  func.func @transform_1(%arg0: i32, %arg1: i32) -> (i32, i32) {
    %c0_i32 = arith.constant 0 : i32
    %c0_i32_0 = arith.constant 0 : i32
    return %arg1, %c0_i32 : i32, i32
  }
  func.func @transform_2(%arg0: i32, %arg1: i32) -> (i32, i32) {
    %c0_i32 = arith.constant 0 : i32
    %c0_i32_0 = arith.constant 0 : i32
    %c0_i32_1 = arith.constant 0 : i32
    return %c0_i32, %c0_i32_0 : i32, i32
  }
  func.func @transform_3(%arg0: i32, %arg1: i32) -> (i32, i32) {
    %c0_i32 = arith.constant 0 : i32
    %c0_i32_0 = arith.constant 0 : i32
    %c0_i32_1 = arith.constant 0 : i32
    return %c0_i32, %c0_i32_0 : i32, i32
  }
  func.func @transform_4(%arg0: i32, %arg1: i32) -> (i32, i32) {
    %c0_i32 = arith.constant 0 : i32
    %c0_i32_0 = arith.constant 0 : i32
    %c0_i32_1 = arith.constant 0 : i32
    return %c0_i32, %c0_i32_0 : i32, i32
  }
  func.func @transform_5(%arg0: i32, %arg1: i32) -> (i32, i32) {
    %c0_i32 = arith.constant 0 : i32
    %c0_i32_0 = arith.constant 0 : i32
    return %arg0, %c0_i32 : i32, i32
  }
}

</mosaic_0001>

<llo_original>
// kernel: binary_classification_forward.1
$region0: #{binary_classification_forward.1}
  #allocation0 [shape = 'u32[]', space=smem, size = 0x4, offset = 0x4, fixed_abs, tag = 'smem constant byte address 0x4 - core index']
  #allocation1 [shape = 'u32[144,128]{1,0:T(1,128)}', space=vmem, size = 0x12000, scoped, tag = 'internal scratch']
  #allocation2 [shape = 'f32[16,512]{1,0:T(8,128)}', space=vmem, size = 0x8000, scoped, tag = 'scratch operand']
  #allocation3 [shape = 'f32[1,1]{1,0:T(1,128)S(6)}', space=smem, size = 0x200, scoped, tag = 'scoped memory for binary_classification_forward.1']
  %s0 = inlined_call_operand.hbm [shape: f32[10,32], index: 0, kind: input, shape index: {}]
  %s1 = inlined_call_operand.hbm [shape: bf16[32,512], index: 1, kind: input, shape index: {}]
  %s2 = inlined_call_operand.vmem [shape: f32[1,512], index: 2, kind: input, shape index: {}]
  %s3 = inlined_call_operand.vmem [shape: f32[1,512], index: 3, kind: input, shape index: {}]
  %s4 = inlined_call_operand.<no memory space> [shape: f32[1,1], index: 4, kind: input, shape index: {}]
  %s5 = inlined_call_operand.vmem [shape: f32[10,1], index: 5, kind: output, shape index: {}]
  %s6 = sld [smem:[#allocation0]]
  $region46: #{binary_classification_forward.1} parent=0
    _
  %s8 = ssub.s32 1, %s6
  %s9 = scalar_select 0, %s8, %s6
  %10 = sst [smem:[#allocation3]] %s4
  $region1: #{binary_classification_forward.1} parent=0
    #allocation4 [shape = 'u8[8192]{0}', space=vmem, size = 0x2000, scoped, tag = 'input window, operand 0, single buffered']
    #allocation5 [shape = 's32[1]{0}', space=sflag, size = 0x4, scoped, tag = 'scoped memory for binary_classification_forward.1']
    #allocation6 [shape = 'u8[32768]{0}', space=vmem, size = 0x8000, scoped, tag = 'input window, operand 1, single buffered']
    #allocation7 [shape = 's32[1]{0}', space=sflag, size = 0x4, scoped, tag = 'scoped memory for binary_classification_forward.1']
    %11 = vsyncpa [#allocation5], 0
    %12 = vsyncpa [#allocation7], 0
    // Predicated region
    $region2: #{binary_classification_forward.1} parent=1 // pred_check
      _
    $region3: #{binary_classification_forward.1} parent=1 // pred_check_branch
      %14 = sbr.rel (0) target = $region5
    $region4: #{binary_classification_forward.1} parent=1 // pred_region
      %s16 = ssub.s32 256, 256
      %17 = vsyncadd [#allocation5], %s16
      %s18 = sshll.u32 [#allocation4], 4
      %s19 = int_to_ptr.vmem [resolvable:$true] %s18
      %24 = dma.hbm_to_vmem [thread:$0]  %s0, 256, %s19, [#allocation5], 128, 128, 8
    $region5: #{binary_classification_forward.1} parent=1 // pred_fallthru
      _
    // Predicated region
    $region6: #{binary_classification_forward.1} parent=1 // pred_check
      _
    $region7: #{binary_classification_forward.1} parent=1 // pred_check_branch
      %26 = sbr.rel (0) target = $region9
    $region8: #{binary_classification_forward.1} parent=1 // pred_region
      %s28 = ssub.s32 1024, 1024
      %29 = vsyncadd [#allocation7], %s28
      %s30 = sshll.u32 [#allocation6], 4
      %s31 = int_to_ptr.vmem [resolvable:$true] %s30
      %36 = dma.hbm_to_vmem [thread:$0]  %s1, 1024, %s31, [#allocation7], 256, 256, 16
    $region9: #{binary_classification_forward.1} parent=1 // pred_fallthru
      _
    // Predicated region
    $region10: #{binary_classification_forward.1} parent=1 // pred_check
      _
    $region11: #{binary_classification_forward.1} parent=1 // pred_check_branch
      %38 = sbr.rel (0) target = $region13
    $region12: #{binary_classification_forward.1} parent=1 // pred_region
      _
    $region13: #{binary_classification_forward.1} parent=1 // pred_fallthru
      _
    // Predicated region
    $region14: #{binary_classification_forward.1} parent=1 // pred_check
      _
    $region15: #{binary_classification_forward.1} parent=1 // pred_check_branch
      %40 = sbr.rel (0) target = $region17
    $region16: #{binary_classification_forward.1} parent=1 // pred_region
      _
    $region17: #{binary_classification_forward.1} parent=1 // pred_fallthru
      _
    // Predicated region
    $region18: #{binary_classification_forward.1} parent=1 // pred_check
      _
    $region19: #{binary_classification_forward.1} parent=1 // pred_check_branch
      %42 = sbr.rel (0) target = $region21
    $region20: #{binary_classification_forward.1} parent=1 // pred_region
      _
    $region21: #{binary_classification_forward.1} parent=1 // pred_fallthru
      _
    // Predicated region
    $region22: #{binary_classification_forward.1} parent=1 // pred_check
      _
    $region23: #{binary_classification_forward.1} parent=1 // pred_check_branch
      %44 = sbr.rel (0) target = $region25
    $region24: #{binary_classification_forward.1} parent=1 // pred_region
      %45 = dma.done [#allocation5], 256
    $region25: #{binary_classification_forward.1} parent=1 // pred_fallthru
      _
    // Predicated region
    $region26: #{binary_classification_forward.1} parent=1 // pred_check
      _
    $region27: #{binary_classification_forward.1} parent=1 // pred_check_branch
      %47 = sbr.rel (0) target = $region29
    $region28: #{binary_classification_forward.1} parent=1 // pred_region
      %48 = dma.done [#allocation7], 1024
    $region29: #{binary_classification_forward.1} parent=1 // pred_fallthru
      _
    %p50 = scmp.eq.s32.totalorder 0, 0
    // Predicated region
    $region30: #{binary_classification_forward.1} parent=1 // pred_check
      %p51 = pneg %p50
    $region31: #{binary_classification_forward.1} parent=1 // pred_check_branch
      %53 = sbr.rel (%p51) target = $region33
    $region32: #{binary_classification_forward.1} parent=1 // pred_region
      %54 = vst [vmem:[#allocation2] sm:$0xff] 0.0
      %55 = vst [vmem:[#allocation2 + $0x8] sm:$0xff] 0.0
      %56 = vst [vmem:[#allocation2 + $0x10] sm:$0xff] 0.0
      %57 = vst [vmem:[#allocation2 + $0x18] sm:$0xff] 0.0
      %58 = vst [vmem:[#allocation2 + $0x20] sm:$0xff] 0.0
      %59 = vst [vmem:[#allocation2 + $0x28] sm:$0xff] 0.0
      %60 = vst [vmem:[#allocation2 + $0x30] sm:$0xff] 0.0
      %61 = vst [vmem:[#allocation2 + $0x38] sm:$0xff] 0.0
    $region33: #{binary_classification_forward.1} parent=1 // pred_fallthru
      _
    %v62 = vld [vmem:[#allocation4] sm:$0xff]
    %v63 = vld [vmem:[#allocation4 + $0x8] sm:$0xff]
    %v64 = vpack.c.bf16 %v63, %v62
    %v65 = vld [vmem:[#allocation6] sm:$0xff]
    %v66 = vld [vmem:[#allocation6 + $0x8] sm:$0xff]
    %v67 = vld [vmem:[#allocation6 + $0x10] sm:$0xff]
    %v68 = vld [vmem:[#allocation6 + $0x18] sm:$0xff]
    %v69 = vld [vmem:[#allocation6 + $0x20] sm:$0xff]
    %v70 = vld [vmem:[#allocation6 + $0x28] sm:$0xff]
    %v71 = vld [vmem:[#allocation6 + $0x30] sm:$0xff]
    %v72 = vld [vmem:[#allocation6 + $0x38] sm:$0xff]
    %v73 = vld [vmem:[#allocation2] sm:$0xff]
    %v74 = vld [vmem:[#allocation2 + $0x8] sm:$0xff]
    %v75 = vld [vmem:[#allocation2 + $0x10] sm:$0xff]
    %v76 = vld [vmem:[#allocation2 + $0x18] sm:$0xff]
    %v77 = vld [vmem:[#allocation2 + $0x20] sm:$0xff]
    %v78 = vld [vmem:[#allocation2 + $0x28] sm:$0xff]
    %v79 = vld [vmem:[#allocation2 + $0x30] sm:$0xff]
    %v80 = vld [vmem:[#allocation2 + $0x38] sm:$0xff]
    %v89 = vunpack.c.l.b16 %v65
    %v90 = vunpack.c.h.b16 %v65
    %v91 = vunpack.c.l.b16 %v66
    %v92 = vunpack.c.h.b16 %v66
    %v93 = vunpack.c.l.b16 %v67
    %v94 = vunpack.c.h.b16 %v67
    %v95 = vunpack.c.l.b16 %v68
    %v96 = vunpack.c.h.b16 %v68
    %v97 = vunpack.c.l.b16 %v69
    %v98 = vunpack.c.h.b16 %v69
    %v99 = vunpack.c.l.b16 %v70
    %v100 = vunpack.c.h.b16 %v70
    %v101 = vunpack.c.l.b16 %v71
    %v102 = vunpack.c.h.b16 %v71
    %v103 = vunpack.c.l.b16 %v72
    %v104 = vunpack.c.h.b16 %v72
    %v105 = vpack.c.b16 %v93, %v89
    %v106 = vpack.c.b16 %v94, %v90
    %v107 = vpack.c.b16 %v95, %v91
    %v108 = vpack.c.b16 %v96, %v92
    %v109 = vpack.c.b16 %v101, %v97
    %v110 = vpack.c.b16 %v102, %v98
    %v111 = vpack.c.b16 %v103, %v99
    %v112 = vpack.c.b16 %v104, %v100
    %vm121 = vcmask 261120
    %v123 = vsel %vm121, %v64, 0
    %125 = vmatprep.subr.bf16.mxu0 %v106
    %126 = vmatpush1.bf16.msra.mxu0 %v105
    %127 = vmatprep.subr.bf16.mxu0 %v110
    %128 = vmatpush1.bf16.msra.mxu0 %v109
    %129 = vmatprep.subr.bf16.mxu0 0
    %130 = vmatpush1.bf16.msra.mxu0 0
    %131 = vmatprep.subr.bf16.mxu0 0
    %132 = vmatpush1.bf16.msra.mxu0 0
    %133 = vmatprep.subr.bf16.mxu0 0
    %134 = vmatpush1.bf16.msra.mxu0 0
    %135 = vmatprep.subr.bf16.mxu0 0
    %136 = vmatpush1.bf16.msra.mxu0 0
    %137 = vmatprep.subr.bf16.mxu0 0
    %138 = vmatpush1.bf16.msra.mxu0 0
    %139 = vmatprep.subr.bf16.mxu0 0
    %140 = vmatpush1.bf16.msra.mxu0 0
    %141 = vmatprep.subr.bf16.mxu0 0
    %142 = vmatpush1.bf16.msra.mxu0 0
    %143 = vmatprep.subr.bf16.mxu0 0
    %144 = vmatpush1.bf16.msra.mxu0 0
    %145 = vmatprep.subr.bf16.mxu0 0
    %146 = vmatpush1.bf16.msra.mxu0 0
    %147 = vmatprep.subr.bf16.mxu0 0
    %148 = vmatpush1.bf16.msra.mxu0 0
    %149 = vmatprep.subr.bf16.mxu0 0
    %150 = vmatpush1.bf16.msra.mxu0 0
    %151 = vmatprep.subr.bf16.mxu0 0
    %152 = vmatpush1.bf16.msra.mxu0 0
    %153 = vmatprep.subr.bf16.mxu0 0
    %154 = vmatpush1.bf16.msra.mxu0 0
    %155 = vmatprep.subr.bf16.mxu0 0
    %156 = vmatpush1.bf16.msra.mxu0 0
    %157 = vmatprep.mubr.bf16.mxu0 0
    %158 = vmatmul.mubr.bf16.gmra.mrb[0].mxu0 %v123
    %v159 = vpop.f32.mrb[0].mxu0
    %v160 = vadd.f32 0.0, %v159
    %v161 = vpop.f32.mrb[0].mxu0
    %v162 = vadd.f32 0.0, %v161
    %v163 = vpop.f32.mrb[0].mxu0
    %v164 = vadd.f32 0.0, %v163
    %v165 = vpop.f32.mrb[0].mxu0
    %v166 = vadd.f32 0.0, %v165
    %167 = vdwg.mxu0
    %168 = vmatprep.subr.bf16.mxu0 %v108
    %169 = vmatpush1.bf16.msra.mxu0 %v107
    %170 = vmatprep.subr.bf16.mxu0 %v112
    %171 = vmatpush1.bf16.msra.mxu0 %v111
    %172 = vmatprep.subr.bf16.mxu0 0
    %173 = vmatpush1.bf16.msra.mxu0 0
    %174 = vmatprep.subr.bf16.mxu0 0
    %175 = vmatpush1.bf16.msra.mxu0 0
    %176 = vmatprep.subr.bf16.mxu0 0
    %177 = vmatpush1.bf16.msra.mxu0 0
    %178 = vmatprep.subr.bf16.mxu0 0
    %179 = vmatpush1.bf16.msra.mxu0 0
    %180 = vmatprep.subr.bf16.mxu0 0
    %181 = vmatpush1.bf16.msra.mxu0 0
    %182 = vmatprep.subr.bf16.mxu0 0
    %183 = vmatpush1.bf16.msra.mxu0 0
    %184 = vmatprep.subr.bf16.mxu0 0
    %185 = vmatpush1.bf16.msra.mxu0 0
    %186 = vmatprep.subr.bf16.mxu0 0
    %187 = vmatpush1.bf16.msra.mxu0 0
    %188 = vmatprep.subr.bf16.mxu0 0
    %189 = vmatpush1.bf16.msra.mxu0 0
    %190 = vmatprep.subr.bf16.mxu0 0
    %191 = vmatpush1.bf16.msra.mxu0 0
    %192 = vmatprep.subr.bf16.mxu0 0
    %193 = vmatpush1.bf16.msra.mxu0 0
    %194 = vmatprep.subr.bf16.mxu0 0
    %195 = vmatpush1.bf16.msra.mxu0 0
    %196 = vmatprep.subr.bf16.mxu0 0
    %197 = vmatpush1.bf16.msra.mxu0 0
    %198 = vmatprep.subr.bf16.mxu0 0
    %199 = vmatpush1.bf16.msra.mxu0 0
    %200 = vmatprep.mubr.bf16.mxu0 0
    %201 = vmatmul.mubr.bf16.gmra.mrb[0].mxu0 %v123
    %v202 = vpop.f32.mrb[0].mxu0
    %v203 = vadd.f32 0.0, %v202
    %v204 = vpop.f32.mrb[0].mxu0
    %v205 = vadd.f32 0.0, %v204
    %v206 = vpop.f32.mrb[0].mxu0
    %v207 = vadd.f32 0.0, %v206
    %v208 = vpop.f32.mrb[0].mxu0
    %v209 = vadd.f32 0.0, %v208
    %210 = vdwg.mxu0
    %v211 = vadd.f32 %v73, %v160
    %v212 = vadd.f32 %v74, %v162
    %v213 = vadd.f32 %v75, %v203
    %v214 = vadd.f32 %v76, %v205
    %v215 = vadd.f32 %v77, %v164
    %v216 = vadd.f32 %v78, %v166
    %v217 = vadd.f32 %v79, %v207
    %v218 = vadd.f32 %v80, %v209
    %219 = vst [vmem:[#allocation2] sm:$0xff] %v211
    %220 = vst [vmem:[#allocation2 + $0x8] sm:$0xff] %v212
    %221 = vst [vmem:[#allocation2 + $0x10] sm:$0xff] %v213
    %222 = vst [vmem:[#allocation2 + $0x18] sm:$0xff] %v214
    %223 = vst [vmem:[#allocation2 + $0x20] sm:$0xff] %v215
    %224 = vst [vmem:[#allocation2 + $0x28] sm:$0xff] %v216
    %225 = vst [vmem:[#allocation2 + $0x30] sm:$0xff] %v217
    %226 = vst [vmem:[#allocation2 + $0x38] sm:$0xff] %v218
    // Predicated region
    $region34: #{binary_classification_forward.1} parent=1 // pred_check
      %p227 = pneg %p50
    $region35: #{binary_classification_forward.1} parent=1 // pred_check_branch
      %229 = sbr.rel (%p227) target = $region37
    $region36: #{binary_classification_forward.1} parent=1 // pred_region
      %v230 = vld [vmem:[#allocation2] sm:$0xff]
      %v231 = vld [vmem:[#allocation2 + $0x8] sm:$0xff]
      %v232 = vld [vmem:[#allocation2 + $0x10] sm:$0xff]
      %v233 = vld [vmem:[#allocation2 + $0x18] sm:$0xff]
      %v234 = vld [vmem:[#allocation2 + $0x20] sm:$0xff]
      %v235 = vld [vmem:[#allocation2 + $0x28] sm:$0xff]
      %v236 = vld [vmem:[#allocation2 + $0x30] sm:$0xff]
      %v237 = vld [vmem:[#allocation2 + $0x38] sm:$0xff]
      %v238 = vld [vmem:[%s2] sm:$0xf]
      %v240 = vlaneseq
      %v241 = vshrl.u32 %v240, 7
      %v242 = vsub.s32 0, %v241
      %v243 = vrot.slane %v238, %v242
      %v244 = vlaneseq
      %v245 = vshrl.u32 %v244, 7
      %v246 = vsub.s32 1, %v245
      %v247 = vrot.slane %v238, %v246
      %v248 = vlaneseq
      %v249 = vshrl.u32 %v248, 7
      %v250 = vsub.s32 2, %v249
      %v251 = vrot.slane %v238, %v250
      %v252 = vlaneseq
      %v253 = vshrl.u32 %v252, 7
      %v254 = vsub.s32 3, %v253
      %v255 = vrot.slane %v238, %v254
      %v260 = vadd.f32 %v230, %v243
      %v261 = vadd.f32 %v231, %v247
      %v262 = vadd.f32 %v232, %v251
      %v263 = vadd.f32 %v233, %v255
      %v264 = vadd.f32 %v234, %v243
      %v265 = vadd.f32 %v235, %v247
      %v266 = vadd.f32 %v236, %v251
      %v267 = vadd.f32 %v237, %v255
      %v268 = vmax.f32 %v260, 0.0
      %v269 = vmax.f32 %v261, 0.0
      %v270 = vmax.f32 %v262, 0.0
      %v271 = vmax.f32 %v263, 0.0
      %v272 = vmax.f32 %v264, 0.0
      %v273 = vmax.f32 %v265, 0.0
      %v274 = vmax.f32 %v266, 0.0
      %v275 = vmax.f32 %v267, 0.0
      %v276 = vld [vmem:[%s3] sm:$0xf]
      %v278 = vlaneseq
      %v279 = vshrl.u32 %v278, 7
      %v280 = vsub.s32 0, %v279
      %v281 = vrot.slane %v276, %v280
      %v282 = vlaneseq
      %v283 = vshrl.u32 %v282, 7
      %v284 = vsub.s32 1, %v283
      %v285 = vrot.slane %v276, %v284
      %v286 = vlaneseq
      %v287 = vshrl.u32 %v286, 7
      %v288 = vsub.s32 2, %v287
      %v289 = vrot.slane %v276, %v288
      %v290 = vlaneseq
      %v291 = vshrl.u32 %v290, 7
      %v292 = vsub.s32 3, %v291
      %v293 = vrot.slane %v276, %v292
      %v298 = vmul.f32 %v268, %v281
      %v299 = vmul.f32 %v269, %v285
      %v300 = vmul.f32 %v270, %v289
      %v301 = vmul.f32 %v271, %v293
      %v302 = vmul.f32 %v272, %v281
      %v303 = vmul.f32 %v273, %v285
      %v304 = vmul.f32 %v274, %v289
      %v305 = vmul.f32 %v275, %v293
      %v306 = vadd.f32 %v298, %v299
      %v307 = vadd.f32 %v306, %v300
      %v308 = vadd.f32 %v307, %v301
      %309 = vadd.xlane.f32.xlu0 %v308
      %v310 = vpop.xlane.xlu0 %309
      %v311 = vadd.f32 %v302, %v303
      %v312 = vadd.f32 %v311, %v304
      %v313 = vadd.f32 %v312, %v305
      %314 = vadd.xlane.f32.xlu0 %v313
      %v315 = vpop.xlane.xlu0 %314
      %s316 = sld [smem:[#allocation3]]
      %v317 = vstv %s316
      %v318 = vadd.f32 %v310, %v317
      %v319 = vadd.f32 %v315, %v317
      %v320 = vxor.u32 %v318, 2147483648
      %v321 = vxor.u32 %v319, 2147483648
      %v322 = vmul.f32 %v320, 1.442695
      %v323 = vpow.pop %v322
      %v324 = vmul.f32 %v321, 1.442695
      %v325 = vpow.pop %v324
      %v326 = vadd.f32 %v323, 1.0
      %v327 = vadd.f32 %v325, 1.0
      %v328 = vrcp.pop %v326
      %v329 = vmul.f32 1.0, %v328
      %v330 = vrcp.pop %v327
      %v331 = vmul.f32 1.0, %v330
      %vm332 = vcmask 7168
      %333 = vst.msk [vmem:[%s5] sm:$0xff] %vm332, %v329
      %334 = vst.msk [vmem:[%s5 + $0x8] sm:$0xff] %vm332, %v331
    $region37: #{binary_classification_forward.1} parent=1 // pred_fallthru
      _
    // Predicated region
    $region38: #{binary_classification_forward.1} parent=1 // pred_check
      _
    $region39: #{binary_classification_forward.1} parent=1 // pred_check_branch
      %336 = sbr.rel (0) target = $region41
    $region40: #{binary_classification_forward.1} parent=1 // pred_region
      _
    $region41: #{binary_classification_forward.1} parent=1 // pred_fallthru
      _
    // Predicated region
    $region42: #{binary_classification_forward.1} parent=1 // pred_check
      _
    $region43: #{binary_classification_forward.1} parent=1 // pred_check_branch
      %338 = sbr.rel (0) target = $region45
    $region44: #{binary_classification_forward.1} parent=1 // pred_region
      _
    $region45: #{binary_classification_forward.1} parent=1 // pred_fallthru
      _
    %339 = vsyncpa [#allocation5], 1
    %340 = vsyncpa [#allocation7], 1

</llo_original>
